<compile_context>
chip_gen: v7x
topology: tpu7x:2x2x1
jax: 0.10.0
libtpu: 0.0.40
codegen_flags: <defaults>
</compile_context>

<pallas_src>
import jax
import jax.numpy as jnp
from jax import lax
from jax.experimental import pallas as pl
from jax.experimental.pallas import tpu as pltpu


def _attention_kernel(x_ref, w_ref, b_ref, o_ref, q_scr, k_scr, v_scr):
    """One block of TB batch rows per grid step.

    x_ref : (TB, S)    f32  input rows (cast to bf16 in-kernel for the MXU)
    w_ref : (3, S, S)  bf16 stacked [Wq.T, Wk.T, Wv.T] (constant block index)
    b_ref : (3, 1, S)  f32  stacked [bq, bk, bv]
    o_ref : (TB, S)    f32  output rows (lane-dense in the query index)
    q_scr/k_scr/v_scr : (TB, S) f32 VMEM scratch holding the projections
    """
    TB, S = x_ref.shape

    # ---------- Projection phase: M=TB block feeds the MXU rows. ----------
    x_bf = x_ref[...].astype(jnp.bfloat16)   # in-register cast, hidden by matmul
    q_scr[...] = jnp.dot(x_bf, w_ref[0], preferred_element_type=jnp.float32) + b_ref[0]
    k_scr[...] = jnp.dot(x_bf, w_ref[1], preferred_element_type=jnp.float32) + b_ref[1]
    v_scr[...] = jnp.dot(x_bf, w_ref[2], preferred_element_type=jnp.float32) + b_ref[2]

    # ---------- Causal mask, built once per grid step (amortized over TB). ----------
    # Transposed layout: axis 0 = key j (sublanes), axis 1 = query i (lanes),
    # so softmax reductions and the final store are lane-dense in the query.
    j_idx = lax.broadcasted_iota(jnp.int32, (S, S), 0)
    i_idx = lax.broadcasted_iota(jnp.int32, (S, S), 1)
    causal = (j_idx <= i_idx).astype(jnp.float32)          # (S, S) 0/1 mask

    # ---------- Softmax phase: one row at a time (working set O(S^2)). ----------
    def _row(r, carry):
        q = q_scr[pl.ds(r, 1), :]                          # (1, S)
        k = k_scr[pl.ds(r, 1), :]                          # (1, S)
        v = v_scr[pl.ds(r, 1), :]                          # (1, S)

        # scores_t[0, j, i] = k[j] * q[i]   (rank-1 outer product, VPU)
        scores_t = k[:, :, None] * q[:, None, :]           # (1, S, S)

        # Row max over *unmasked* scores from the key extremes:
        #   max_j q_i*k_j = max(q_i*kmax, q_i*kmin)   (no (S,S) reduce needed).
        # exp(s - m) <= 1 (no overflow); masked terms are zeroed AFTER the exp,
        # which is numerically safe for realistic score ranges and matches the
        # reference (whose -1e9 entries underflow to exactly 0 after softmax).
        kmax = jnp.max(k, axis=1, keepdims=True)           # (1, 1)
        kmin = jnp.min(k, axis=1, keepdims=True)           # (1, 1)
        m = jnp.maximum(q * kmax, q * kmin)                # (1, S)

        e = jnp.exp(scores_t - m[:, None, :])              # (1, S, S)  EUP
        e = e * causal[None]                               # zero masked (j > i)

        denom = jnp.sum(e, axis=1, keepdims=True)                  # (1, 1, S)
        num = jnp.sum(e * v[:, :, None], axis=1, keepdims=True)    # (1, 1, S)

        out = num * pl.reciprocal(denom, approx=True)      # EUP reciprocal
        o_ref[pl.ds(r, 1), :] = out[0].astype(o_ref.dtype)
        return carry

    lax.fori_loop(0, TB, _row, 0)


def prepare_params(params, compute_dtype=jnp.bfloat16):
    """One-time weight prep (hoisted out of the per-call path).

    Returns:
      w_stack : (3, S, S) = stack([Wq.T, Wk.T, Wv.T]) in compute_dtype (bf16)
      b_stack : (3, 1, S) = stack([bq, bk, bv]) in f32
    so the kernel computes y = x @ W.T + b exactly like nn.Linear.
    """
    wq, bq, wk, bk, wv, bv = params
    w_stack = jnp.stack([wq.T, wk.T, wv.T], axis=0).astype(compute_dtype)
    b_stack = jnp.stack([bq, bk, bv], axis=0).reshape(3, 1, -1).astype(jnp.float32)
    return w_stack, b_stack


def _pick_block_rows(batch, max_rows=256):
    """Rows per grid step: large enough to fill MXU rows (toward 128/256),
    but keep >= 2 grid steps when the batch allows it (v7x has 2 TensorCores)."""
    tb = min(batch, max_rows)
    if tb == batch and batch >= 16 and (batch // 2) % 8 == 0:
        tb = batch // 2          # two grid steps -> both TCs get work on v7x
    return tb


@jax.jit
def attention_forward(x, w_stack, b_stack):
    """x: (B, S) f32 -> (B, S) f32, matching Attention.forward(x, mask=True)."""
    B, S = x.shape
    tb = _pick_block_rows(B)
    num_blocks = pl.cdiv(B, tb)
    Bp = num_blocks * tb
    x_p = x if Bp == B else jnp.pad(x, ((0, Bp - B), (0, 0)))

    # Explicit VMEM budget: resident bf16 weights + (worst case) double-buffered
    # row blocks + q/k/v scratch + (S,S) softmax temporaries, with headroom.
    est = (3 * S * S * 2 * 2          # stacked bf16 weights (x2 buffering)
           + 3 * S * 4 * 2            # bias
           + 2 * tb * S * 4 * 2       # x + out blocks, double buffered
           + 3 * tb * S * 4           # q/k/v scratch
           + 6 * S * S * 4)           # mask + per-row softmax temporaries
    vmem_limit = int(min(max(2 * est, 16 << 20), 56 << 20))   # stay under v7x 64 MiB

    out = pl.pallas_call(
        _attention_kernel,
        out_shape=jax.ShapeDtypeStruct((Bp, S), jnp.float32),
        grid_spec=pltpu.PrefetchScalarGridSpec(
            num_scalar_prefetch=0,
            grid=(num_blocks,),
            in_specs=[
                pl.BlockSpec((tb, S), lambda b: (b, 0)),        # x row block
                pl.BlockSpec((3, S, S), lambda b: (0, 0, 0)),   # weights (resident)
                pl.BlockSpec((3, 1, S), lambda b: (0, 0, 0)),   # bias (resident)
            ],
            out_specs=pl.BlockSpec((tb, S), lambda b: (b, 0)),
            scratch_shapes=[
                pltpu.VMEM((tb, S), jnp.float32),   # q projections
                pltpu.VMEM((tb, S), jnp.float32),   # k projections
                pltpu.VMEM((tb, S), jnp.float32),   # v projections
            ],
        ),
        compiler_params=pltpu.CompilerParams(
            dimension_semantics=("parallel",),      # batch blocks are independent
            vmem_limit_bytes=vmem_limit,
        ),
    )(x_p, w_stack, b_stack)
    return out[:B]


def attention_ref(x, params):
    """Pure-JAX f32 reference mirroring the PyTorch forward exactly."""
    wq, bq, wk, bk, wv, bv = params
    q = x @ wq.T + bq
    k = x @ wk.T + bk
    v = x @ wv.T + bv
    scores = q[:, :, None] * k[:, None, :]
    S = x.shape[1]
    maskmat = jnp.tril(jnp.ones((S, S), dtype=jnp.float32))
    scores = jnp.where(maskmat[None] == 0, jnp.float32(-1e9), scores)
    w = jax.nn.softmax(scores, axis=-1)
    return jnp.einsum("bij,bj->bi", w, v)


def init_params(key, seq_len):
    """Deterministic synthetic parameters matching nn.Linear(seq_len, seq_len)."""
    ks = jax.random.split(key, 6)
    scale = 0.1
    wq = scale * jax.random.normal(ks[0], (seq_len, seq_len), jnp.float32)
    bq = scale * jax.random.normal(ks[1], (seq_len,), jnp.float32)
    wk = scale * jax.random.normal(ks[2], (seq_len, seq_len), jnp.float32)
    bk = scale * jax.random.normal(ks[3], (seq_len,), jnp.float32)
    wv = scale * jax.random.normal(ks[4], (seq_len, seq_len), jnp.float32)
    bv = scale * jax.random.normal(ks[5], (seq_len,), jnp.float32)
    return (wq, bq, wk, bk, wv, bv)


if __name__ == "__main__":
    B, S = 4, 8  # small shapes consistent with the module (seq_len scaled down)
    key = jax.random.PRNGKey(0)
    kx, kp = jax.random.split(key)
    x = jax.random.normal(kx, (B, S), jnp.float32)
    params = init_params(kp, S)

    # Weight transpose + stack + bf16 cast happens once, outside the call path.
    w_stack, b_stack = prepare_params(params)

    out = attention_forward(x, w_stack, b_stack)
    out = jax.block_until_ready(out)

    ref = attention_ref(x, params)
    assert out.shape == (B, S)
    # bf16 MXU operands + approx reciprocal -> loosened tolerance vs f32 ref.
    assert jnp.allclose(out, ref, atol=2e-2, rtol=2e-2), (out, ref)
    print("KERNEL_OK")
</pallas_src>

<mosaic_0001>
module attributes {stable_mosaic.version = 11 : i64} {
  func.func @_attention_kernel(%arg0: i32, %arg1: memref<4x8xf32, #tpu.memory_space<vmem>>, %arg2: memref<3x8x8xbf16, #tpu.memory_space<vmem>>, %arg3: memref<3x1x8xf32, #tpu.memory_space<vmem>>, %arg4: memref<4x8xf32, #tpu.memory_space<vmem>>, %arg5: memref<4x8xf32, #tpu.memory_space<vmem>>, %arg6: memref<4x8xf32, #tpu.memory_space<vmem>>, %arg7: memref<4x8xf32, #tpu.memory_space<vmem>>) attributes {dimension_semantics = [#tpu.dimension_semantics<parallel>], iteration_bounds = array<i64: 1>, scalar_prefetch = 0 : i64, scratch_operands = 3 : i64, tpu.core_type = #tpu.core_type<tc>, window_params = [{transform_indices = @transform_0, window_bounds = array<i64: 4, 8>}, {pipeline_mode = #tpu.pipeline_mode<synchronous>, transform_indices = @transform_1, window_bounds = array<i64: 3, 8, 8>}, {pipeline_mode = #tpu.pipeline_mode<synchronous>, transform_indices = @transform_2, window_bounds = array<i64: 3, 1, 8>}, {transform_indices = @transform_3, window_bounds = array<i64: 4, 8>}]} {
    %c0 = arith.constant 0 : index
    %c0_0 = arith.constant 0 : index
    %0 = vector.load %arg1[%c0, %c0_0] : memref<4x8xf32, #tpu.memory_space<vmem>>, vector<4x8xf32>
    %1 = arith.truncf %0 : vector<4x8xf32> to vector<4x8xbf16>
    %c0_1 = arith.constant 0 : index
    %c0_2 = arith.constant 0 : index
    %c0_3 = arith.constant 0 : index
    %2 = vector.load %arg2[%c0_1, %c0_2, %c0_3] : memref<3x8x8xbf16, #tpu.memory_space<vmem>>, vector<1x8x8xbf16>
    %3 = vector.shape_cast %2 : vector<1x8x8xbf16> to vector<8x8xbf16>
    %cst = arith.constant dense<0.000000e+00> : vector<4x8xf32>
    %4 = tpu.matmul %1, %3, %cst {dimension_numbers = #tpu.dot_dimension_numbers<[1], [0], [0], [1], [0, 0, 1, 1], [], []>} : vector<4x8xbf16>, vector<8x8xbf16>, vector<4x8xf32> -> vector<4x8xf32>
    %c0_4 = arith.constant 0 : index
    %c0_5 = arith.constant 0 : index
    %c0_6 = arith.constant 0 : index
    %5 = vector.load %arg3[%c0_4, %c0_5, %c0_6] : memref<3x1x8xf32, #tpu.memory_space<vmem>>, vector<1x1x8xf32>
    %6 = vector.shape_cast %5 : vector<1x1x8xf32> to vector<1x8xf32>
    %7 = vector.broadcast %6 : vector<1x8xf32> to vector<4x8xf32>
    %8 = arith.addf %4, %7 : vector<4x8xf32>
    %c0_7 = arith.constant 0 : index
    %c0_8 = arith.constant 0 : index
    %9 = vector.load %arg5[%c0_7, %c0_8] : memref<4x8xf32, #tpu.memory_space<vmem>>, vector<4x8xf32>
    tpu.vector_store %arg5[%c0_7, %c0_8], %8 {strides = array<i32>} : memref<4x8xf32, #tpu.memory_space<vmem>>, vector<4x8xf32>,
    %c1 = arith.constant 1 : index
    %c0_9 = arith.constant 0 : index
    %c0_10 = arith.constant 0 : index
    %10 = vector.load %arg2[%c1, %c0_9, %c0_10] : memref<3x8x8xbf16, #tpu.memory_space<vmem>>, vector<1x8x8xbf16>
    %11 = vector.shape_cast %10 : vector<1x8x8xbf16> to vector<8x8xbf16>
    %cst_11 = arith.constant dense<0.000000e+00> : vector<4x8xf32>
    %12 = tpu.matmul %1, %11, %cst_11 {dimension_numbers = #tpu.dot_dimension_numbers<[1], [0], [0], [1], [0, 0, 1, 1], [], []>} : vector<4x8xbf16>, vector<8x8xbf16>, vector<4x8xf32> -> vector<4x8xf32>
    %c1_12 = arith.constant 1 : index
    %c0_13 = arith.constant 0 : index
    %c0_14 = arith.constant 0 : index
    %13 = vector.load %arg3[%c1_12, %c0_13, %c0_14] : memref<3x1x8xf32, #tpu.memory_space<vmem>>, vector<1x1x8xf32>
    %14 = vector.shape_cast %13 : vector<1x1x8xf32> to vector<1x8xf32>
    %15 = vector.broadcast %14 : vector<1x8xf32> to vector<4x8xf32>
    %16 = arith.addf %12, %15 : vector<4x8xf32>
    %c0_15 = arith.constant 0 : index
    %c0_16 = arith.constant 0 : index
    %17 = vector.load %arg6[%c0_15, %c0_16] : memref<4x8xf32, #tpu.memory_space<vmem>>, vector<4x8xf32>
    tpu.vector_store %arg6[%c0_15, %c0_16], %16 {strides = array<i32>} : memref<4x8xf32, #tpu.memory_space<vmem>>, vector<4x8xf32>,
    %c2 = arith.constant 2 : index
    %c0_17 = arith.constant 0 : index
    %c0_18 = arith.constant 0 : index
    %18 = vector.load %arg2[%c2, %c0_17, %c0_18] : memref<3x8x8xbf16, #tpu.memory_space<vmem>>, vector<1x8x8xbf16>
    %19 = vector.shape_cast %18 : vector<1x8x8xbf16> to vector<8x8xbf16>
    %cst_19 = arith.constant dense<0.000000e+00> : vector<4x8xf32>
    %20 = tpu.matmul %1, %19, %cst_19 {dimension_numbers = #tpu.dot_dimension_numbers<[1], [0], [0], [1], [0, 0, 1, 1], [], []>} : vector<4x8xbf16>, vector<8x8xbf16>, vector<4x8xf32> -> vector<4x8xf32>
    %c2_20 = arith.constant 2 : index
    %c0_21 = arith.constant 0 : index
    %c0_22 = arith.constant 0 : index
    %21 = vector.load %arg3[%c2_20, %c0_21, %c0_22] : memref<3x1x8xf32, #tpu.memory_space<vmem>>, vector<1x1x8xf32>
    %22 = vector.shape_cast %21 : vector<1x1x8xf32> to vector<1x8xf32>
    %23 = vector.broadcast %22 : vector<1x8xf32> to vector<4x8xf32>
    %24 = arith.addf %20, %23 : vector<4x8xf32>
    %c0_23 = arith.constant 0 : index
    %c0_24 = arith.constant 0 : index
    %25 = vector.load %arg7[%c0_23, %c0_24] : memref<4x8xf32, #tpu.memory_space<vmem>>, vector<4x8xf32>
    tpu.vector_store %arg7[%c0_23, %c0_24], %24 {strides = array<i32>} : memref<4x8xf32, #tpu.memory_space<vmem>>, vector<4x8xf32>,
    %26 = tpu.iota {dimensions = array<i32: 0>} : vector<8x8xi32>
    %27 = tpu.iota {dimensions = array<i32: 1>} : vector<8x8xi32>
    %28 = arith.cmpi sle, %26, %27 : vector<8x8xi32>
    %29 = arith.extui %28 : vector<8x8xi1> to vector<8x8xi32>
    %30 = arith.sitofp %29 : vector<8x8xi32> to vector<8x8xf32>
    %c0_i32 = arith.constant 0 : i32
    %c4_i32 = arith.constant 4 : i32
    %31 = arith.addi %c0_i32, %c4_i32 : i32
    %c1_i32 = arith.constant 1 : i32
    scf.for %arg8 = %c0_i32 to %31 step %c1_i32  : i32 {
      %32 = arith.index_cast %arg8 : i32 to index
      %c0_26 = arith.constant 0 : index
      %33 = vector.load %arg5[%32, %c0_26] : memref<4x8xf32, #tpu.memory_space<vmem>>, vector<1x8xf32>
      %34 = arith.index_cast %arg8 : i32 to index
      %c0_27 = arith.constant 0 : index
      %35 = vector.load %arg6[%34, %c0_27] : memref<4x8xf32, #tpu.memory_space<vmem>>, vector<1x8xf32>
      %36 = arith.index_cast %arg8 : i32 to index
      %c0_28 = arith.constant 0 : index
      %37 = vector.load %arg7[%36, %c0_28] : memref<4x8xf32, #tpu.memory_space<vmem>>, vector<1x8xf32>
      %38 = vector.shape_cast %35 : vector<1x8xf32> to vector<1x8x1xf32>
      %39 = vector.shape_cast %33 : vector<1x8xf32> to vector<1x1x8xf32>
      %40 = vector.broadcast %38 : vector<1x8x1xf32> to vector<1x8x8xf32>
      %41 = vector.broadcast %39 : vector<1x1x8xf32> to vector<1x8x8xf32>
      %42 = arith.mulf %40, %41 : vector<1x8x8xf32>
      %cst_29 = arith.constant dense<0xFF800000> : vector<1xf32>
      %43 = vector.multi_reduction <maximumf>, %35, %cst_29 [1] : vector<1x8xf32> to vector<1xf32>
      %44 = vector.shape_cast %43 : vector<1xf32> to vector<1x1xf32>
      %cst_30 = arith.constant dense<0x7F800000> : vector<1xf32>
      %45 = vector.multi_reduction <minimumf>, %35, %cst_30 [1] : vector<1x8xf32> to vector<1xf32>
      %46 = vector.shape_cast %45 : vector<1xf32> to vector<1x1xf32>
      %47 = vector.broadcast %44 : vector<1x1xf32> to vector<1x8xf32>
      %48 = arith.mulf %33, %47 : vector<1x8xf32>
      %49 = vector.broadcast %46 : vector<1x1xf32> to vector<1x8xf32>
      %50 = arith.mulf %33, %49 : vector<1x8xf32>
      %51 = arith.maximumf %48, %50 : vector<1x8xf32>
      %52 = vector.shape_cast %51 : vector<1x8xf32> to vector<1x1x8xf32>
      %53 = vector.broadcast %52 : vector<1x1x8xf32> to vector<1x8x8xf32>
      %54 = arith.subf %42, %53 : vector<1x8x8xf32>
      %55 = math.exp %54 : vector<1x8x8xf32>
      %56 = vector.shape_cast %30 : vector<8x8xf32> to vector<1x8x8xf32>
      %57 = arith.mulf %55, %56 : vector<1x8x8xf32>
      %cst_31 = arith.constant dense<0.000000e+00> : vector<1x8xf32>
      %58 = vector.multi_reduction <add>, %57, %cst_31 [1] : vector<1x8x8xf32> to vector<1x8xf32>
      %59 = vector.shape_cast %58 : vector<1x8xf32> to vector<1x1x8xf32>
      %60 = vector.shape_cast %37 : vector<1x8xf32> to vector<1x8x1xf32>
      %61 = vector.broadcast %60 : vector<1x8x1xf32> to vector<1x8x8xf32>
      %62 = arith.mulf %57, %61 : vector<1x8x8xf32>
      %cst_32 = arith.constant dense<0.000000e+00> : vector<1x8xf32>
      %63 = vector.multi_reduction <add>, %62, %cst_32 [1] : vector<1x8x8xf32> to vector<1x8xf32>
      %64 = vector.shape_cast %63 : vector<1x8xf32> to vector<1x1x8xf32>
      %65 = tpu.reciprocal %59 {approx = true} : vector<1x1x8xf32> -> vector<1x1x8xf32>
      %66 = arith.mulf %64, %65 : vector<1x1x8xf32>
      %67 = vector.shape_cast %66 : vector<1x1x8xf32> to vector<1x8xf32>
      %68 = arith.index_cast %arg8 : i32 to index
      %c0_33 = arith.constant 0 : index
      %69 = vector.load %arg4[%68, %c0_33] : memref<4x8xf32, #tpu.memory_space<vmem>>, vector<1x8xf32>
      tpu.vector_store %arg4[%68, %c0_33], %67 {strides = array<i32>} : memref<4x8xf32, #tpu.memory_space<vmem>>, vector<1x8xf32>,
    }
    %c4_i32_25 = arith.constant 4 : i32
    return
  }
  func.func @transform_0(%arg0: i32) -> (i32, i32) {
    %c0_i32 = arith.constant 0 : i32
    %c0_i32_0 = arith.constant 0 : i32
    return %arg0, %c0_i32 : i32, i32
  }
  func.func @transform_1(%arg0: i32) -> (i32, i32, i32) {
    %c0_i32 = arith.constant 0 : i32
    %c0_i32_0 = arith.constant 0 : i32
    %c0_i32_1 = arith.constant 0 : i32
    %c0_i32_2 = arith.constant 0 : i32
    return %c0_i32, %c0_i32_0, %c0_i32_1 : i32, i32, i32
  }
  func.func @transform_2(%arg0: i32) -> (i32, i32, i32) {
    %c0_i32 = arith.constant 0 : i32
    %c0_i32_0 = arith.constant 0 : i32
    %c0_i32_1 = arith.constant 0 : i32
    %c0_i32_2 = arith.constant 0 : i32
    return %c0_i32, %c0_i32_0, %c0_i32_1 : i32, i32, i32
  }
  func.func @transform_3(%arg0: i32) -> (i32, i32) {
    %c0_i32 = arith.constant 0 : i32
    %c0_i32_0 = arith.constant 0 : i32
    return %arg0, %c0_i32 : i32, i32
  }
}

</mosaic_0001>

<llo_original>
// kernel: attention_forward.1
$region0: #{attention_forward.1}
  #allocation0 [shape = 'u32[]', space=smem, size = 0x4, offset = 0x4, fixed_abs, tag = 'smem constant byte address 0x4 - core index']
  #allocation1 [shape = 'u32[144,128]{1,0:T(1,128)}', space=vmem, size = 0x12000, scoped, tag = 'internal scratch']
  #allocation2 [shape = 'f32[4,8]{1,0:T(4,128)}', space=vmem, size = 0x800, scoped, tag = 'scratch operand']
  #allocation3 [shape = 'f32[4,8]{1,0:T(4,128)}', space=vmem, size = 0x800, scoped, tag = 'scratch operand']
  #allocation4 [shape = 'f32[4,8]{1,0:T(4,128)}', space=vmem, size = 0x800, scoped, tag = 'scratch operand']
  %s0 = inlined_call_operand.hbm [shape: f32[4,8], index: 0, kind: input, shape index: {}]
  %s1 = inlined_call_operand.hbm [shape: bf16[3,8,8], index: 1, kind: input, shape index: {}]
  %s2 = inlined_call_operand.vmem [shape: f32[3,1,8], index: 2, kind: input, shape index: {}]
  %s3 = inlined_call_operand.hbm [shape: f32[4,8], index: 3, kind: output, shape index: {}]
  %s4 = sld [smem:[#allocation0]]
  $region37: #{attention_forward.1} parent=0
    _
  %s6 = ssub.s32 1, %s4
  %s7 = scalar_select 0, %s6, %s4
  $region1: #{attention_forward.1} parent=0
    #allocation5 [shape = 'u8[2048]{0}', space=vmem, size = 0x800, scoped, tag = 'input window, operand 0, single buffered']
    #allocation6 [shape = 's32[1]{0}', space=sflag, size = 0x4, scoped, tag = 'scoped memory for attention_forward.1']
    #allocation7 [shape = 's32[1]{0}', space=sflag, size = 0x4, scoped, tag = 'scoped memory for attention_forward.1']
    #allocation8 [shape = 'u8[6144]{0}', space=vmem, size = 0x1800, scoped, tag = 'input window, operand 1, single buffered']
    #allocation9 [shape = 's32[1]{0}', space=sflag, size = 0x4, scoped, tag = 'scoped memory for attention_forward.1']
    #allocation10 [shape = 'u8[2048]{0}', space=vmem, size = 0x800, scoped, tag = 'output window, operand 0, single buffered']
    %8 = vsyncpa [#allocation6], 0
    %9 = vsyncpa [#allocation9], 0
    %10 = vsyncpa [#allocation7], 0
    // Predicated region
    $region2: #{attention_forward.1} parent=1 // pred_check
      _
    $region3: #{attention_forward.1} parent=1 // pred_check_branch
      %12 = sbr.rel (0) target = $region5
    $region4: #{attention_forward.1} parent=1 // pred_region
      %s14 = ssub.s32 64, 64
      %15 = vsyncadd [#allocation6], %s14
      %s17 = sshll.u32 [#allocation5], 4
      %s18 = int_to_ptr.vmem [resolvable:$true] %s17
      %20 = dma.hbm_to_vmem [thread:$0]  %s0, 64, %s18, [#allocation6]
    $region5: #{attention_forward.1} parent=1 // pred_fallthru
      _
    // Predicated region
    $region6: #{attention_forward.1} parent=1 // pred_check
      _
    $region7: #{attention_forward.1} parent=1 // pred_check_branch
      %22 = sbr.rel (0) target = $region9
    $region8: #{attention_forward.1} parent=1 // pred_region
      %s24 = ssub.s32 192, 192
      %25 = vsyncadd [#allocation9], %s24
      %s26 = sshll.u32 [#allocation8], 4
      %s27 = int_to_ptr.vmem [resolvable:$true] %s26
      %32 = dma.hbm_to_vmem [thread:$0]  %s1, 192, %s27, [#allocation9], 64, 64, 4
    $region9: #{attention_forward.1} parent=1 // pred_fallthru
      _
    // Predicated region
    $region10: #{attention_forward.1} parent=1 // pred_check
      _
    $region11: #{attention_forward.1} parent=1 // pred_check_branch
      %34 = sbr.rel (0) target = $region13
    $region12: #{attention_forward.1} parent=1 // pred_region
      _
    $region13: #{attention_forward.1} parent=1 // pred_fallthru
      _
    // Predicated region
    $region14: #{attention_forward.1} parent=1 // pred_check
      _
    $region15: #{attention_forward.1} parent=1 // pred_check_branch
      %36 = sbr.rel (0) target = $region17
    $region16: #{attention_forward.1} parent=1 // pred_region
      %37 = dma.done [#allocation6], 64
    $region17: #{attention_forward.1} parent=1 // pred_fallthru
      _
    // Predicated region
    $region18: #{attention_forward.1} parent=1 // pred_check
      _
    $region19: #{attention_forward.1} parent=1 // pred_check_branch
      %39 = sbr.rel (0) target = $region21
    $region20: #{attention_forward.1} parent=1 // pred_region
      %40 = dma.done [#allocation9], 192
    $region21: #{attention_forward.1} parent=1 // pred_fallthru
      _
    %v42 = vld [vmem:[#allocation5] sm:$0xf]
    %v43 = vpack.c.bf16 %v42, %v42
    %v44 = vld [vmem:[#allocation8] sm:$0xf]
    %v45 = vld [vmem:[%s2] sm:$0x1]
    %v47 = vlaneseq
    %v48 = vshrl.u32 %v47, 7
    %v49 = vsub.s32 0, %v48
    %v50 = vrot.slane %v45, %v49
    %vm52 = vcmask 64512
    %v54 = vsel %vm52, %v43, 0
    %vm56 = vcmask 1043456
    %v58 = vsel %vm56, %v44, 0
    %60 = vmatprep.subr.bf16.mxu0 0
    %61 = vmatpush1.bf16.msra.mxu0 %v58
    %62 = vmatprep.subr.bf16.mxu0 0
    %63 = vmatpush1.bf16.msra.mxu0 0
    %64 = vmatprep.subr.bf16.mxu0 0
    %65 = vmatpush1.bf16.msra.mxu0 0
    %66 = vmatprep.subr.bf16.mxu0 0
    %67 = vmatpush1.bf16.msra.mxu0 0
    %68 = vmatprep.subr.bf16.mxu0 0
    %69 = vmatpush1.bf16.msra.mxu0 0
    %70 = vmatprep.subr.bf16.mxu0 0
    %71 = vmatpush1.bf16.msra.mxu0 0
    %72 = vmatprep.subr.bf16.mxu0 0
    %73 = vmatpush1.bf16.msra.mxu0 0
    %74 = vmatprep.subr.bf16.mxu0 0
    %75 = vmatpush1.bf16.msra.mxu0 0
    %76 = vmatprep.subr.bf16.mxu0 0
    %77 = vmatpush1.bf16.msra.mxu0 0
    %78 = vmatprep.subr.bf16.mxu0 0
    %79 = vmatpush1.bf16.msra.mxu0 0
    %80 = vmatprep.subr.bf16.mxu0 0
    %81 = vmatpush1.bf16.msra.mxu0 0
    %82 = vmatprep.subr.bf16.mxu0 0
    %83 = vmatpush1.bf16.msra.mxu0 0
    %84 = vmatprep.subr.bf16.mxu0 0
    %85 = vmatpush1.bf16.msra.mxu0 0
    %86 = vmatprep.subr.bf16.mxu0 0
    %87 = vmatpush1.bf16.msra.mxu0 0
    %88 = vmatprep.subr.bf16.mxu0 0
    %89 = vmatpush1.bf16.msra.mxu0 0
    %90 = vmatprep.subr.bf16.mxu0 0
    %91 = vmatpush1.bf16.msra.mxu0 0
    %92 = vmatprep.mubr.bf16.mxu0 0
    %93 = vmatmul.mubr.bf16.gmra.mrb[0].mxu0 %v54
    %v94 = vpop.f32.mrb[0].mxu0
    %v95 = vadd.f32 %v50, %v94
    %v96 = vpop.f32.mrb[0].mxu0
    %v97 = vpop.f32.mrb[0].mxu0
    %v98 = vpop.f32.mrb[0].mxu0
    %99 = vdwg.mxu0
    %vm100 = vcmask 60416
    %101 = vst.msk [vmem:[#allocation2] sm:$0xf] %vm100, %v95
    %s102 = scalar_lea.vmem [#allocation8], 4
    %v103 = vld [vmem:[%s102] sm:$0xf]
    %s104 = scalar_lea.vmem %s2, 1
    %v105 = vld [vmem:[%s104] sm:$0x1]
    %v107 = vlaneseq
    %v108 = vshrl.u32 %v107, 7
    %v109 = vsub.s32 0, %v108
    %v110 = vrot.slane %v105, %v109
    %v113 = vsel %vm56, %v103, 0
    %115 = vmatprep.subr.bf16.mxu0 0
    %116 = vmatpush1.bf16.msra.mxu0 %v113
    %117 = vmatprep.subr.bf16.mxu0 0
    %118 = vmatpush1.bf16.msra.mxu0 0
    %119 = vmatprep.subr.bf16.mxu0 0
    %120 = vmatpush1.bf16.msra.mxu0 0
    %121 = vmatprep.subr.bf16.mxu0 0
    %122 = vmatpush1.bf16.msra.mxu0 0
    %123 = vmatprep.subr.bf16.mxu0 0
    %124 = vmatpush1.bf16.msra.mxu0 0
    %125 = vmatprep.subr.bf16.mxu0 0
    %126 = vmatpush1.bf16.msra.mxu0 0
    %127 = vmatprep.subr.bf16.mxu0 0
    %128 = vmatpush1.bf16.msra.mxu0 0
    %129 = vmatprep.subr.bf16.mxu0 0
    %130 = vmatpush1.bf16.msra.mxu0 0
    %131 = vmatprep.subr.bf16.mxu0 0
    %132 = vmatpush1.bf16.msra.mxu0 0
    %133 = vmatprep.subr.bf16.mxu0 0
    %134 = vmatpush1.bf16.msra.mxu0 0
    %135 = vmatprep.subr.bf16.mxu0 0
    %136 = vmatpush1.bf16.msra.mxu0 0
    %137 = vmatprep.subr.bf16.mxu0 0
    %138 = vmatpush1.bf16.msra.mxu0 0
    %139 = vmatprep.subr.bf16.mxu0 0
    %140 = vmatpush1.bf16.msra.mxu0 0
    %141 = vmatprep.subr.bf16.mxu0 0
    %142 = vmatpush1.bf16.msra.mxu0 0
    %143 = vmatprep.subr.bf16.mxu0 0
    %144 = vmatpush1.bf16.msra.mxu0 0
    %145 = vmatprep.subr.bf16.mxu0 0
    %146 = vmatpush1.bf16.msra.mxu0 0
    %147 = vmatprep.mubr.bf16.mxu0 0
    %148 = vmatmul.mubr.bf16.gmra.mrb[0].mxu0 %v54
    %v149 = vpop.f32.mrb[0].mxu0
    %v150 = vadd.f32 %v110, %v149
    %v151 = vpop.f32.mrb[0].mxu0
    %v152 = vpop.f32.mrb[0].mxu0
    %v153 = vpop.f32.mrb[0].mxu0
    %154 = vdwg.mxu0
    %155 = vst.msk [vmem:[#allocation3] sm:$0xf] %vm100, %v150
    %s156 = scalar_lea.vmem [#allocation8], 8
    %v157 = vld [vmem:[%s156] sm:$0xf]
    %s158 = scalar_lea.vmem %s2, 2
    %v159 = vld [vmem:[%s158] sm:$0x1]
    %v161 = vlaneseq
    %v162 = vshrl.u32 %v161, 7
    %v163 = vsub.s32 0, %v162
    %v164 = vrot.slane %v159, %v163
    %v167 = vsel %vm56, %v157, 0
    %169 = vmatprep.subr.bf16.mxu0 0
    %170 = vmatpush1.bf16.msra.mxu0 %v167
    %171 = vmatprep.subr.bf16.mxu0 0
    %172 = vmatpush1.bf16.msra.mxu0 0
    %173 = vmatprep.subr.bf16.mxu0 0
    %174 = vmatpush1.bf16.msra.mxu0 0
    %175 = vmatprep.subr.bf16.mxu0 0
    %176 = vmatpush1.bf16.msra.mxu0 0
    %177 = vmatprep.subr.bf16.mxu0 0
    %178 = vmatpush1.bf16.msra.mxu0 0
    %179 = vmatprep.subr.bf16.mxu0 0
    %180 = vmatpush1.bf16.msra.mxu0 0
    %181 = vmatprep.subr.bf16.mxu0 0
    %182 = vmatpush1.bf16.msra.mxu0 0
    %183 = vmatprep.subr.bf16.mxu0 0
    %184 = vmatpush1.bf16.msra.mxu0 0
    %185 = vmatprep.subr.bf16.mxu0 0
    %186 = vmatpush1.bf16.msra.mxu0 0
    %187 = vmatprep.subr.bf16.mxu0 0
    %188 = vmatpush1.bf16.msra.mxu0 0
    %189 = vmatprep.subr.bf16.mxu0 0
    %190 = vmatpush1.bf16.msra.mxu0 0
    %191 = vmatprep.subr.bf16.mxu0 0
    %192 = vmatpush1.bf16.msra.mxu0 0
    %193 = vmatprep.subr.bf16.mxu0 0
    %194 = vmatpush1.bf16.msra.mxu0 0
    %195 = vmatprep.subr.bf16.mxu0 0
    %196 = vmatpush1.bf16.msra.mxu0 0
    %197 = vmatprep.subr.bf16.mxu0 0
    %198 = vmatpush1.bf16.msra.mxu0 0
    %199 = vmatprep.subr.bf16.mxu0 0
    %200 = vmatpush1.bf16.msra.mxu0 0
    %201 = vmatprep.mubr.bf16.mxu0 0
    %202 = vmatmul.mubr.bf16.gmra.mrb[0].mxu0 %v54
    %v203 = vpop.f32.mrb[0].mxu0
    %v204 = vadd.f32 %v164, %v203
    %v205 = vpop.f32.mrb[0].mxu0
    %v206 = vpop.f32.mrb[0].mxu0
    %v207 = vpop.f32.mrb[0].mxu0
    %208 = vdwg.mxu0
    %209 = vst.msk [vmem:[#allocation4] sm:$0xf] %vm100, %v204
    %v210 = vlaneseq
    %v211 = vshrl.u32 %v210, 7
    %v212 = vlaneseq
    %v213 = vand.u32 %v212, 127
    %vm214 = vcmp.le.s32.totalorder %v211, %v213
    %v215 = vsel %vm214, 1, 0
    %v216 = vcvt.s32.f32 %v215
    loop: start=0, step=1, limit=4
    $region22: #{attention_forward.1} parent=1 // loop_pre_header
      _
    $region23: #{attention_forward.1} parent=1 // loop_header
      %s218 = sphi 0, %s222
      %p219 = scmp.ge.s32.totalorder %s218, 4
    $region24: #{attention_forward.1} parent=1 // loop_header_branch
      %221 = sbr.rel (%p219) target = $region28
    $region25: #{attention_forward.1} parent=1 // loop_body
      %s223 = scalar_lea.vmem [#allocation2], %s218
      %v224 = vld [vmem:[%s223] sm:$0x1]
      %s225 = scalar_lea.vmem [#allocation3], %s218
      %v226 = vld [vmem:[%s225] sm:$0x1]
      %s227 = scalar_lea.vmem [#allocation4], %s218
      %v228 = vld [vmem:[%s227] sm:$0x1]
      %v229 = vlaneseq
      %v230 = vshrl.u32 %v229, 7
      %v231 = vsub.s32 0, %v230
      %v232 = vrot.slane %v226, %v231
      %234 = vbcast.lane.b32.xlu0 %v232, 256
      %v235 = vpop.permute.xlu0 %234
      %v236 = vlaneseq
      %v237 = vshrl.u32 %v236, 7
      %v238 = vsub.s32 0, %v237
      %v239 = vrot.slane %v224, %v238
      %v240 = vmul.f32 %v235, %v239
      %vm241 = vcmask 57344
      %v242 = vsel %vm241, %v226, -inf
      %243 = vmax.xlane.f32.xlu0 %v242
      %v244 = vpop.xlane.xlu0 %243
      %v245 = vsel %vm241, %v226, inf
      %246 = vmin.xlane.f32.xlu0 %v245
      %v247 = vpop.xlane.xlu0 %246
      %v248 = vmul.f32 %v224, %v244
      %v249 = vmul.f32 %v224, %v247
      %v250 = vmax.f32 %v248, %v249
      %v251 = vlaneseq
      %v252 = vshrl.u32 %v251, 7
      %v253 = vsub.s32 0, %v252
      %v254 = vrot.slane %v250, %v253
      %v255 = vsub.f32 %v240, %v254
      %v256 = vmul.f32 %v255, 1.442695
      %v257 = vpow.pop %v256
      %v258 = vmul.f32 %v257, %v216
      %v259 = vsel %vm52, %v258, 0.0
      %v260 = vrot.slane %v259, 4
      %v261 = vadd.f32 %v259, %v260
      %v262 = vrot.slane %v261, 2
      %v263 = vadd.f32 %v261, %v262
      %v264 = vrot.slane %v263, 1
      %v265 = vadd.f32 %v263, %v264
      %v266 = vlaneseq
      %v267 = vshrl.u32 %v266, 7
      %v268 = vsub.s32 0, %v267
      %v269 = vrot.slane %v228, %v268
      %271 = vbcast.lane.b32.xlu0 %v269, 256
      %v272 = vpop.permute.xlu0 %271
      %v273 = vmul.f32 %v258, %v272
      %v274 = vsel %vm52, %v273, 0.0
      %v275 = vrot.slane %v274, 4
      %v276 = vadd.f32 %v274, %v275
      %v277 = vrot.slane %v276, 2
      %v278 = vadd.f32 %v276, %v277
      %v279 = vrot.slane %v278, 1
      %v280 = vadd.f32 %v278, %v279
      %v281 = vrcp.pop %v265
      %v282 = vmul.f32 %v280, %v281
      %s283 = scalar_lea.vmem [#allocation10], %s218
      %284 = vst.msk [vmem:[%s283] sm:$0x1] %vm241, %v282
    $region26: #{attention_forward.1} parent=1 // loop_footer
      %s222 = sadd.s32 1, %s218
    $region27: #{attention_forward.1} parent=1 // loop_footer_branch
      %217 = sbr.rel target = $region23
    $region28: #{attention_forward.1} parent=1 // loop_exit
      _
    // Predicated region
    $region29: #{attention_forward.1} parent=1 // pred_check
      _
    $region30: #{attention_forward.1} parent=1 // pred_check_branch
      %286 = sbr.rel (0) target = $region32
    $region31: #{attention_forward.1} parent=1 // pred_region
      %s288 = ssub.s32 64, 64
      %289 = vsyncadd [#allocation7], %s288
      %s291 = sshll.u32 [#allocation10], 4
      %s292 = int_to_ptr.vmem [resolvable:$true] %s291
      %294 = dma.vmem_to_hbm [thread:$0]  %s292, 64, %s3, [#allocation7]
    $region32: #{attention_forward.1} parent=1 // pred_fallthru
      _
    // Predicated region
    $region33: #{attention_forward.1} parent=1 // pred_check
      _
    $region34: #{attention_forward.1} parent=1 // pred_check_branch
      %296 = sbr.rel (0) target = $region36
    $region35: #{attention_forward.1} parent=1 // pred_region
      %297 = dma.done [#allocation7], 64
    $region36: #{attention_forward.1} parent=1 // pred_fallthru
      _
    %298 = vsyncpa [#allocation6], 1
    %299 = vsyncpa [#allocation9], 1
    %300 = vsyncpa [#allocation7], 1

</llo_original>
